<compile_context>
chip_gen: v7x
topology: tpu7x:2x2x1
jax: 0.10.0
libtpu: 0.0.40
codegen_flags: <defaults>
</compile_context>

<pallas_src>
import functools
import math

import jax
import jax.numpy as jnp
from jax.experimental import pallas as pl
from jax.experimental.pallas import tpu as pltpu


# ----------------------------------------------------------------------------
# Kernel: one (batch, query-tile, head) triple per grid step.
# ----------------------------------------------------------------------------
def _mha_kernel(*refs, causal, has_bias, shared_kv, need_weights):
    it = iter(refs)
    q_ref = next(it)                                   # (1, tq, D)   f32
    k_src_ref = next(it)                               # (1, S, D)    f32
    v_src_ref = k_src_ref if shared_kv else next(it)   # (1, S, D)    f32
    wq_ref = next(it)                                  # (1, D, d_k)  bf16 (pre-scaled)
    bq_ref = next(it)                                  # (1, 1, d_k)  f32  (pre-scaled)
    wk_ref = next(it)                                  # (1, D, d_k)  bf16
    bk_ref = next(it)                                  # (1, 1, d_k)  f32
    wv_ref = next(it)                                  # (1, D, d_k)  bf16
    bv_ref = next(it)                                  # (1, 1, d_k)  f32
    wo_ref = next(it)                                  # (1, d_k, D)  bf16
    bo_ref = next(it)                                  # (1, D)       f32
    bias_ref = next(it) if has_bias else None          # (1, tq, S)   f32 additive
    out_ref = next(it)                                 # (1, tq, D)
    attn_ref = next(it) if need_weights else None      # (1, 1, tq, S)
    acc_ref = next(it)                                 # (tq, D)      f32 scratch
    kc_ref = next(it)                                  # (H, S, d_k)  bf16 scratch
    vc_ref = next(it)                                  # (H, S, d_k)  bf16 scratch

    t = pl.program_id(1)
    h = pl.program_id(2)
    tq = q_ref.shape[1]
    S = kc_ref.shape[1]

    # --- K/V projection for this head, cached across query tiles ------------
    @pl.when(t == 0)
    def _():
        k_in = k_src_ref[0].astype(jnp.bfloat16)                           # (S, D)
        v_in = k_in if shared_kv else v_src_ref[0].astype(jnp.bfloat16)
        k_h = jnp.dot(k_in, wk_ref[0], preferred_element_type=jnp.float32) + bk_ref[0]
        v_h = jnp.dot(v_in, wv_ref[0], preferred_element_type=jnp.float32) + bv_ref[0]
        kc_ref[h] = k_h.astype(jnp.bfloat16)
        vc_ref[h] = v_h.astype(jnp.bfloat16)

    # --- output-projection accumulator init at the first head ---------------
    @pl.when(h == 0)
    def _():
        acc_ref[...] = jnp.zeros_like(acc_ref)

    # --- Q projection (1/sqrt(d_k) already folded into wq/bq) ---------------
    q_in = q_ref[0].astype(jnp.bfloat16)                                   # (tq, D)
    q_h = jnp.dot(q_in, wq_ref[0], preferred_element_type=jnp.float32) + bq_ref[0]

    k_h = kc_ref[h]                                                        # (S, d_k) bf16
    v_h = vc_ref[h]                                                        # (S, d_k) bf16

    # --- scores: (tq, d_k) x (S, d_k)^T, contraction on the minor dim -------
    scores = jax.lax.dot_general(
        q_h.astype(jnp.bfloat16), k_h,
        (((1,), (1,)), ((), ())),
        preferred_element_type=jnp.float32)                                # (tq, S)

    # --- masking in f32 (VPU compare+select co-issues with MXU work) --------
    if causal:
        row = jax.lax.broadcasted_iota(jnp.int32, (tq, S), 0) + t * tq
        col = jax.lax.broadcasted_iota(jnp.int32, (tq, S), 1)
        scores = jnp.where(col <= row, scores, jnp.float32(-1e9))
    if bias_ref is not None:
        scores = scores + bias_ref[0]

    # --- softmax over keys (f32); reciprocal goes to the EUP slot -----------
    m = jnp.max(scores, axis=-1, keepdims=True)
    e = jnp.exp(scores - m)
    denom = jnp.sum(e, axis=-1, keepdims=True)
    attn = e * pl.reciprocal(denom, approx=True)                           # (tq, S) f32

    # TODO(synk): nn.Dropout on the attention weights is identity (eval mode).

    if attn_ref is not None:
        attn_ref[0, 0] = attn.astype(attn_ref.dtype)

    # --- context + this head's slice of the output projection ---------------
    ctx = jnp.dot(attn.astype(jnp.bfloat16), v_h,
                  preferred_element_type=jnp.float32)                      # (tq, d_k)
    acc_ref[...] += jnp.dot(ctx.astype(jnp.bfloat16), wo_ref[0],
                            preferred_element_type=jnp.float32)            # (tq, D)

    # --- last head: add output bias and store --------------------------------
    @pl.when(h == pl.num_programs(2) - 1)
    def _():
        out_ref[0] = (acc_ref[...] + bo_ref[...]).astype(out_ref.dtype)


# ----------------------------------------------------------------------------
# Wrapper
# ----------------------------------------------------------------------------
def multi_head_attention(query, key, value, params, n_heads, *, mask=None,
                         causal=False, need_weights=True,
                         weights_dtype=jnp.float32, out_dtype=None):
    """Forward pass of MultiHeadAttention (dropout = identity / eval mode)."""
    if causal and mask is not None:
        raise ValueError("pass either causal=True or an explicit mask, not both")

    B, T, D = query.shape
    S = key.shape[1]
    assert D % n_heads == 0
    H = n_heads
    d_k = D // H
    shared_kv = value is key
    out_dtype = query.dtype if out_dtype is None else out_dtype

    # Query-tile size: multiples of 128 bound per-step VMEM / vreg pressure for
    # long sequences; small sequences use the whole T (still a legal block).
    tq = T
    for cand in (512, 256, 128):
        if T % cand == 0:
            tq = cand
            break
    n_t = T // tq
    # TODO(synk): the key axis S is kept fully resident per step; very long S
    # would need flash-style S tiling with an online softmax.

    f32, bf16 = jnp.float32, jnp.bfloat16
    scale = 1.0 / math.sqrt(d_k)

    # Per-head weight layouts (head-major leading axis so BlockSpec slices whole
    # (D, d_k)/(d_k, D) planes); weights bf16 for the MXU, biases stay f32.
    wq_h = (params["wq"].astype(f32) * scale).reshape(D, H, d_k).transpose(1, 0, 2).astype(bf16)
    bq_h = (params["bq"].astype(f32) * scale).reshape(H, 1, d_k)
    wk_h = params["wk"].reshape(D, H, d_k).transpose(1, 0, 2).astype(bf16)
    bk_h = params["bk"].astype(f32).reshape(H, 1, d_k)
    wv_h = params["wv"].reshape(D, H, d_k).transpose(1, 0, 2).astype(bf16)
    bv_h = params["bv"].astype(f32).reshape(H, 1, d_k)
    wo_h = params["wo"].reshape(H, d_k, D).astype(bf16)
    bo = params["bo"].astype(f32).reshape(1, D)

    has_bias = mask is not None

    inputs = [query, key]
    in_specs = [
        pl.BlockSpec((1, tq, D), lambda b, t, h: (b, t, 0)),      # query tile
        pl.BlockSpec((1, S, D), lambda b, t, h: (b, 0, 0)),       # key source
    ]
    if not shared_kv:
        inputs.append(value)
        in_specs.append(pl.BlockSpec((1, S, D), lambda b, t, h: (b, 0, 0)))

    head_w_spec = pl.BlockSpec((1, D, d_k), lambda b, t, h: (h, 0, 0))
    head_b_spec = pl.BlockSpec((1, 1, d_k), lambda b, t, h: (h, 0, 0))
    inputs += [wq_h, bq_h, wk_h, bk_h, wv_h, bv_h, wo_h, bo]
    in_specs += [
        head_w_spec, head_b_spec,                                 # wq, bq
        head_w_spec, head_b_spec,                                 # wk, bk
        head_w_spec, head_b_spec,                                 # wv, bv
        pl.BlockSpec((1, d_k, D), lambda b, t, h: (h, 0, 0)),     # wo (per-head rows)
        pl.BlockSpec((1, D), lambda b, t, h: (0, 0)),             # bo
    ]
    # TODO(synk): grid-invariant weight specs could use pipeline_mode=pl.Buffered(1)
    # to skip double-buffering and free a bit of VMEM on v7x.

    if has_bias:
        # Fallback for arbitrary masks: stream an additive f32 bias from HBM.
        # The causal fast path builds the mask in-kernel and skips this read.
        m_ = mask
        if m_.ndim == 4:                                          # torch path (B,1,T,S)
            m_ = m_[:, 0]
        bias = jnp.where(m_ == 0, jnp.float32(-1e9), jnp.float32(0.0))
        inputs.append(bias)
        in_specs.append(pl.BlockSpec((1, tq, S), lambda b, t, h: (b, t, 0)))

    out_shape = [jax.ShapeDtypeStruct((B, T, D), out_dtype)]
    out_specs = [pl.BlockSpec((1, tq, D), lambda b, t, h: (b, t, 0))]
    if need_weights:
        out_shape.append(jax.ShapeDtypeStruct((B, H, T, S), weights_dtype))
        out_specs.append(pl.BlockSpec((1, 1, tq, S), lambda b, t, h: (b, h, t, 0)))

    scratch_shapes = [
        pltpu.VMEM((tq, D), jnp.float32),        # output-projection accumulator
        pltpu.VMEM((H, S, d_k), jnp.bfloat16),   # K cache for the current batch element
        pltpu.VMEM((H, S, d_k), jnp.bfloat16),   # V cache for the current batch element
    ]

    kernel = functools.partial(
        _mha_kernel, causal=causal, has_bias=has_bias,
        shared_kv=shared_kv, need_weights=need_weights)

    # VMEM budget: raise above the 32 MiB scoped default, scaled to the chip
    # (v5e/v6e 128 MiB physical -> up to 96 MiB; v7x 64 MiB -> ~48 MiB).
    try:
        cap = pltpu.get_tpu_info().vmem_capacity_bytes
        vmem_limit = min((cap * 3) // 4, 96 * 1024 * 1024)
    except Exception:
        vmem_limit = 48 * 1024 * 1024

    # Advisory cost estimate so XLA schedules this custom call sensibly.
    flops = 2 * B * (T * D * D            # Q projection
                     + 2 * S * D * D      # K and V projections
                     + 2 * H * T * S * d_k  # scores + context
                     + T * D * D)         # output projection
    transcendentals = B * H * T * S
    bytes_accessed = (4 * (query.size + key.size + (0 if shared_kv else value.size))
                      + 2 * (wq_h.size + wk_h.size + wv_h.size + wo_h.size)
                      + 4 * (bq_h.size + bk_h.size + bv_h.size + bo.size)
                      + 4 * B * T * D
                      + (jnp.dtype(weights_dtype).itemsize * B * H * T * S if need_weights else 0)
                      + (4 * B * T * S if has_bias else 0))
    cost = pl.CostEstimate(flops=int(flops),
                           transcendentals=int(transcendentals),
                           bytes_accessed=int(bytes_accessed))

    results = pl.pallas_call(
        kernel,
        out_shape=tuple(out_shape),
        grid_spec=pltpu.PrefetchScalarGridSpec(
            num_scalar_prefetch=0,
            grid=(B, n_t, H),
            in_specs=in_specs,
            out_specs=out_specs,
            scratch_shapes=scratch_shapes,
        ),
        compiler_params=pltpu.CompilerParams(
            # Head axis is a reduction (output-projection accumulator) and the
            # K/V cache is filled at t == 0, so t/h stay on one core; batch is
            # the megacore-parallel axis.
            dimension_semantics=("parallel", "arbitrary", "arbitrary"),
            vmem_limit_bytes=int(vmem_limit),
        ),
        cost_estimate=cost,
    )(*inputs)

    if need_weights:
        out, attn_w = results
        return out, attn_w
    out = results[0] if isinstance(results, (tuple, list)) else results
    return out, None


# ----------------------------------------------------------------------------
# Pure-JAX reference mirroring the PyTorch module exactly.
# ----------------------------------------------------------------------------
def _ref_mha(query, key, value, mask, p, n_heads):
    B, T, D = query.shape
    S = key.shape[1]
    d_k = D // n_heads

    def split(x):
        return x.reshape(B, -1, n_heads, d_k).transpose(0, 2, 1, 3)

    q = split(query @ p["wq"] + p["bq"])
    k = split(key @ p["wk"] + p["bk"])
    v = split(value @ p["wv"] + p["bv"])
    sc = jnp.einsum("bhtd,bhsd->bhts", q, k) / jnp.sqrt(jnp.float32(d_k))
    if mask is not None:
        sc = jnp.where(mask[:, None, :, :] == 0, jnp.float32(-1e9), sc)
    w = jax.nn.softmax(sc, axis=-1)
    ctx = jnp.einsum("bhts,bhsd->bhtd", w, v).transpose(0, 2, 1, 3).reshape(B, T, D)
    return ctx @ p["wo"] + p["bo"], w


# ----------------------------------------------------------------------------
# Main
# ----------------------------------------------------------------------------
if __name__ == "__main__":
    B, T, S = 2, 8, 8
    D, H = 32, 4

    root = jax.random.PRNGKey(0)
    kq, kk, kv_, ko, kx = jax.random.split(root, 5)

    def lin(k, fan_in, fan_out):
        kw, kb = jax.random.split(k)
        s = 1.0 / jnp.sqrt(jnp.float32(fan_in))
        w = jax.random.uniform(kw, (fan_in, fan_out), jnp.float32, -s, s)
        b = jax.random.uniform(kb, (fan_out,), jnp.float32, -s, s)
        return w, b

    params = {}
    params["wq"], params["bq"] = lin(kq, D, D)
    params["wk"], params["bk"] = lin(kk, D, D)
    params["wv"], params["bv"] = lin(kv_, D, D)
    params["wo"], params["bo"] = lin(ko, D, D)

    x = jax.random.normal(kx, (B, T, D), jnp.float32)

    # Causal self-attention: mask built in-kernel (no (B,T,S) bias streamed).
    out, attn_w = multi_head_attention(x, x, x, params, n_heads=H, causal=True)
    jax.block_until_ready((out, attn_w))

    # Reference uses the equivalent explicit tril mask (torch convention: 1=keep).
    mask = jnp.broadcast_to(jnp.tril(jnp.ones((T, T), jnp.float32)), (B, T, T))
    ref_out, ref_w = _ref_mha(x, x, x, mask, params, H)

    assert out.shape == (B, T, D) and attn_w.shape == (B, H, T, S)
    assert jnp.allclose(out, ref_out, rtol=2e-2, atol=2e-2), \
        float(jnp.max(jnp.abs(out - ref_out)))
    assert jnp.allclose(attn_w, ref_w, rtol=2e-2, atol=2e-2), \
        float(jnp.max(jnp.abs(attn_w - ref_w)))

    print("KERNEL_OK")
</pallas_src>

<mosaic_0001>
module attributes {stable_mosaic.version = 11 : i64} {
  func.func @_mha_kernel(%arg0: i32, %arg1: i32, %arg2: i32, %arg3: memref<1x8x32xf32, #tpu.memory_space<vmem>>, %arg4: memref<1x8x32xf32, #tpu.memory_space<vmem>>, %arg5: memref<1x32x8xbf16, #tpu.memory_space<vmem>>, %arg6: memref<1x1x8xf32, #tpu.memory_space<vmem>>, %arg7: memref<1x32x8xbf16, #tpu.memory_space<vmem>>, %arg8: memref<1x1x8xf32, #tpu.memory_space<vmem>>, %arg9: memref<1x32x8xbf16, #tpu.memory_space<vmem>>, %arg10: memref<1x1x8xf32, #tpu.memory_space<vmem>>, %arg11: memref<1x8x32xbf16, #tpu.memory_space<vmem>>, %arg12: memref<1x32xf32, #tpu.memory_space<vmem>>, %arg13: memref<1x8x32xf32, #tpu.memory_space<vmem>>, %arg14: memref<1x1x8x8xf32, #tpu.memory_space<vmem>>, %arg15: memref<8x32xf32, #tpu.memory_space<vmem>>, %arg16: memref<4x8x8xbf16, #tpu.memory_space<vmem>>, %arg17: memref<4x8x8xbf16, #tpu.memory_space<vmem>>) attributes {dimension_semantics = [#tpu.dimension_semantics<parallel>, #tpu.dimension_semantics<arbitrary>, #tpu.dimension_semantics<arbitrary>], iteration_bounds = array<i64: 2, 1, 4>, scalar_prefetch = 0 : i64, scratch_operands = 3 : i64, tpu.core_type = #tpu.core_type<tc>, window_params = [{transform_indices = @transform_0, window_bounds = array<i64: 1, 8, 32>}, {transform_indices = @transform_1, window_bounds = array<i64: 1, 8, 32>}, {transform_indices = @transform_2, window_bounds = array<i64: 1, 32, 8>}, {transform_indices = @transform_3, window_bounds = array<i64: 1, 1, 8>}, {transform_indices = @transform_4, window_bounds = array<i64: 1, 32, 8>}, {transform_indices = @transform_5, window_bounds = array<i64: 1, 1, 8>}, {transform_indices = @transform_6, window_bounds = array<i64: 1, 32, 8>}, {transform_indices = @transform_7, window_bounds = array<i64: 1, 1, 8>}, {transform_indices = @transform_8, window_bounds = array<i64: 1, 8, 32>}, {pipeline_mode = #tpu.pipeline_mode<synchronous>, transform_indices = @transform_9, window_bounds = array<i64: 1, 32>}, {transform_indices = @transform_10, window_bounds = array<i64: 1, 8, 32>}, {transform_indices = @transform_11, window_bounds = array<i64: 1, 1, 8, 8>}]} {
    %c0_i32 = arith.constant 0 : i32
    %0 = arith.cmpi eq, %arg1, %c0_i32 : i32
    %1 = arith.extui %0 : i1 to i32
    %c0_i32_0 = arith.constant 0 : i32
    %2 = arith.cmpi ne, %1, %c0_i32_0 : i32
    scf.if %2 {
      %c0_33 = arith.constant 0 : index
      %c0_34 = arith.constant 0 : index
      %c0_35 = arith.constant 0 : index
      %57 = vector.load %arg4[%c0_33, %c0_34, %c0_35] : memref<1x8x32xf32, #tpu.memory_space<vmem>>, vector<1x8x32xf32>
      %58 = vector.shape_cast %57 : vector<1x8x32xf32> to vector<8x32xf32>
      %59 = arith.truncf %58 : vector<8x32xf32> to vector<8x32xbf16>
      %c0_36 = arith.constant 0 : index
      %c0_37 = arith.constant 0 : index
      %c0_38 = arith.constant 0 : index
      %60 = vector.load %arg7[%c0_36, %c0_37, %c0_38] : memref<1x32x8xbf16, #tpu.memory_space<vmem>>, vector<1x32x8xbf16>
      %61 = vector.shape_cast %60 : vector<1x32x8xbf16> to vector<32x8xbf16>
      %cst_39 = arith.constant dense<0.000000e+00> : vector<8x8xf32>
      %62 = tpu.matmul %59, %61, %cst_39 {dimension_numbers = #tpu.dot_dimension_numbers<[1], [0], [0], [1], [0, 0, 1, 1], [], []>} : vector<8x32xbf16>, vector<32x8xbf16>, vector<8x8xf32> -> vector<8x8xf32>
      %c0_40 = arith.constant 0 : index
      %c0_41 = arith.constant 0 : index
      %c0_42 = arith.constant 0 : index
      %63 = vector.load %arg8[%c0_40, %c0_41, %c0_42] : memref<1x1x8xf32, #tpu.memory_space<vmem>>, vector<1x1x8xf32>
      %64 = vector.shape_cast %63 : vector<1x1x8xf32> to vector<1x8xf32>
      %65 = vector.broadcast %64 : vector<1x8xf32> to vector<8x8xf32>
      %66 = arith.addf %62, %65 : vector<8x8xf32>
      %c0_43 = arith.constant 0 : index
      %c0_44 = arith.constant 0 : index
      %c0_45 = arith.constant 0 : index
      %67 = vector.load %arg9[%c0_43, %c0_44, %c0_45] : memref<1x32x8xbf16, #tpu.memory_space<vmem>>, vector<1x32x8xbf16>
      %68 = vector.shape_cast %67 : vector<1x32x8xbf16> to vector<32x8xbf16>
      %cst_46 = arith.constant dense<0.000000e+00> : vector<8x8xf32>
      %69 = tpu.matmul %59, %68, %cst_46 {dimension_numbers = #tpu.dot_dimension_numbers<[1], [0], [0], [1], [0, 0, 1, 1], [], []>} : vector<8x32xbf16>, vector<32x8xbf16>, vector<8x8xf32> -> vector<8x8xf32>
      %c0_47 = arith.constant 0 : index
      %c0_48 = arith.constant 0 : index
      %c0_49 = arith.constant 0 : index
      %70 = vector.load %arg10[%c0_47, %c0_48, %c0_49] : memref<1x1x8xf32, #tpu.memory_space<vmem>>, vector<1x1x8xf32>
      %71 = vector.shape_cast %70 : vector<1x1x8xf32> to vector<1x8xf32>
      %72 = vector.broadcast %71 : vector<1x8xf32> to vector<8x8xf32>
      %73 = arith.addf %69, %72 : vector<8x8xf32>
      %74 = arith.truncf %66 : vector<8x8xf32> to vector<8x8xbf16>
      %75 = arith.index_cast %arg2 : i32 to index
      %c0_50 = arith.constant 0 : index
      %c0_51 = arith.constant 0 : index
      %76 = vector.load %arg16[%75, %c0_50, %c0_51] : memref<4x8x8xbf16, #tpu.memory_space<vmem>>, vector<1x8x8xbf16>
      %77 = vector.shape_cast %76 : vector<1x8x8xbf16> to vector<8x8xbf16>
      %78 = vector.shape_cast %74 : vector<8x8xbf16> to vector<1x8x8xbf16>
      tpu.vector_store %arg16[%75, %c0_50, %c0_51], %78 {strides = array<i32>} : memref<4x8x8xbf16, #tpu.memory_space<vmem>>, vector<1x8x8xbf16>,
      %79 = arith.truncf %73 : vector<8x8xf32> to vector<8x8xbf16>
      %80 = arith.index_cast %arg2 : i32 to index
      %c0_52 = arith.constant 0 : index
      %c0_53 = arith.constant 0 : index
      %81 = vector.load %arg17[%80, %c0_52, %c0_53] : memref<4x8x8xbf16, #tpu.memory_space<vmem>>, vector<1x8x8xbf16>
      %82 = vector.shape_cast %81 : vector<1x8x8xbf16> to vector<8x8xbf16>
      %83 = vector.shape_cast %79 : vector<8x8xbf16> to vector<1x8x8xbf16>
      tpu.vector_store %arg17[%80, %c0_52, %c0_53], %83 {strides = array<i32>} : memref<4x8x8xbf16, #tpu.memory_space<vmem>>, vector<1x8x8xbf16>,
    } else {
    }
    %c0_i32_1 = arith.constant 0 : i32
    %3 = arith.cmpi eq, %arg2, %c0_i32_1 : i32
    %4 = arith.extui %3 : i1 to i32
    %c0_i32_2 = arith.constant 0 : i32
    %5 = arith.cmpi ne, %4, %c0_i32_2 : i32
    scf.if %5 {
      %cst_33 = arith.constant 0.000000e+00 : f32
      %57 = vector.broadcast %cst_33 : f32 to vector<8x32xf32>
      %c0_34 = arith.constant 0 : index
      %c0_35 = arith.constant 0 : index
      %58 = vector.load %arg15[%c0_34, %c0_35] : memref<8x32xf32, #tpu.memory_space<vmem>>, vector<8x32xf32>
      tpu.vector_store %arg15[%c0_34, %c0_35], %57 {strides = array<i32>} : memref<8x32xf32, #tpu.memory_space<vmem>>, vector<8x32xf32>,
    } else {
    }
    %c0 = arith.constant 0 : index
    %c0_3 = arith.constant 0 : index
    %c0_4 = arith.constant 0 : index
    %6 = vector.load %arg3[%c0, %c0_3, %c0_4] : memref<1x8x32xf32, #tpu.memory_space<vmem>>, vector<1x8x32xf32>
    %7 = vector.shape_cast %6 : vector<1x8x32xf32> to vector<8x32xf32>
    %8 = arith.truncf %7 : vector<8x32xf32> to vector<8x32xbf16>
    %c0_5 = arith.constant 0 : index
    %c0_6 = arith.constant 0 : index
    %c0_7 = arith.constant 0 : index
    %9 = vector.load %arg5[%c0_5, %c0_6, %c0_7] : memref<1x32x8xbf16, #tpu.memory_space<vmem>>, vector<1x32x8xbf16>
    %10 = vector.shape_cast %9 : vector<1x32x8xbf16> to vector<32x8xbf16>
    %cst = arith.constant dense<0.000000e+00> : vector<8x8xf32>
    %11 = tpu.matmul %8, %10, %cst {dimension_numbers = #tpu.dot_dimension_numbers<[1], [0], [0], [1], [0, 0, 1, 1], [], []>} : vector<8x32xbf16>, vector<32x8xbf16>, vector<8x8xf32> -> vector<8x8xf32>
    %c0_8 = arith.constant 0 : index
    %c0_9 = arith.constant 0 : index
    %c0_10 = arith.constant 0 : index
    %12 = vector.load %arg6[%c0_8, %c0_9, %c0_10] : memref<1x1x8xf32, #tpu.memory_space<vmem>>, vector<1x1x8xf32>
    %13 = vector.shape_cast %12 : vector<1x1x8xf32> to vector<1x8xf32>
    %14 = vector.broadcast %13 : vector<1x8xf32> to vector<8x8xf32>
    %15 = arith.addf %11, %14 : vector<8x8xf32>
    %16 = arith.index_cast %arg2 : i32 to index
    %c0_11 = arith.constant 0 : index
    %c0_12 = arith.constant 0 : index
    %17 = vector.load %arg16[%16, %c0_11, %c0_12] : memref<4x8x8xbf16, #tpu.memory_space<vmem>>, vector<1x8x8xbf16>
    %18 = vector.shape_cast %17 : vector<1x8x8xbf16> to vector<8x8xbf16>
    %19 = arith.index_cast %arg2 : i32 to index
    %c0_13 = arith.constant 0 : index
    %c0_14 = arith.constant 0 : index
    %20 = vector.load %arg17[%19, %c0_13, %c0_14] : memref<4x8x8xbf16, #tpu.memory_space<vmem>>, vector<1x8x8xbf16>
    %21 = vector.shape_cast %20 : vector<1x8x8xbf16> to vector<8x8xbf16>
    %22 = arith.truncf %15 : vector<8x8xf32> to vector<8x8xbf16>
    %cst_15 = arith.constant dense<0.000000e+00> : vector<8x8xf32>
    %23 = tpu.matmul %22, %18, %cst_15 {dimension_numbers = #tpu.dot_dimension_numbers<[1], [1], [0], [0], [0, 0, 1, 0], [], []>} : vector<8x8xbf16>, vector<8x8xbf16>, vector<8x8xf32> -> vector<8x8xf32>
    %24 = tpu.iota {dimensions = array<i32: 0>} : vector<8x8xi32>
    %c8_i32 = arith.constant 8 : i32
    %25 = arith.muli %arg1, %c8_i32 : i32
    %26 = vector.broadcast %25 : i32 to vector<8x8xi32>
    %27 = arith.addi %24, %26 : vector<8x8xi32>
    %28 = tpu.iota {dimensions = array<i32: 1>} : vector<8x8xi32>
    %29 = arith.cmpi sle, %28, %27 : vector<8x8xi32>
    %cst_16 = arith.constant -1.000000e+09 : f32
    %30 = vector.broadcast %cst_16 : f32 to vector<8x8xf32>
    %31 = arith.select %29, %23, %30 : vector<8x8xi1>, vector<8x8xf32>
    %cst_17 = arith.constant dense<0xFF800000> : vector<8xf32>
    %32 = vector.multi_reduction <maximumf>, %31, %cst_17 [1] : vector<8x8xf32> to vector<8xf32>
    %33 = vector.shape_cast %32 : vector<8xf32> to vector<8x1xf32>
    %34 = vector.broadcast %33 : vector<8x1xf32> to vector<8x8xf32>
    %35 = arith.subf %31, %34 : vector<8x8xf32>
    %36 = math.exp %35 : vector<8x8xf32>
    %cst_18 = arith.constant dense<0.000000e+00> : vector<8xf32>
    %37 = vector.multi_reduction <add>, %36, %cst_18 [1] : vector<8x8xf32> to vector<8xf32>
    %38 = vector.shape_cast %37 : vector<8xf32> to vector<8x1xf32>
    %39 = tpu.reciprocal %38 {approx = true} : vector<8x1xf32> -> vector<8x1xf32>
    %40 = vector.broadcast %39 : vector<8x1xf32> to vector<8x8xf32>
    %41 = arith.mulf %36, %40 : vector<8x8xf32>
    %c0_19 = arith.constant 0 : index
    %c0_20 = arith.constant 0 : index
    %c0_21 = arith.constant 0 : index
    %c0_22 = arith.constant 0 : index
    %42 = vector.load %arg14[%c0_19, %c0_20, %c0_21, %c0_22] : memref<1x1x8x8xf32, #tpu.memory_space<vmem>>, vector<1x1x8x8xf32>
    %43 = vector.shape_cast %42 : vector<1x1x8x8xf32> to vector<8x8xf32>
    %44 = vector.shape_cast %41 : vector<8x8xf32> to vector<1x1x8x8xf32>
    tpu.vector_store %arg14[%c0_19, %c0_20, %c0_21, %c0_22], %44 {strides = array<i32>} : memref<1x1x8x8xf32, #tpu.memory_space<vmem>>, vector<1x1x8x8xf32>,
    %45 = arith.truncf %41 : vector<8x8xf32> to vector<8x8xbf16>
    %cst_23 = arith.constant dense<0.000000e+00> : vector<8x8xf32>
    %46 = tpu.matmul %45, %21, %cst_23 {dimension_numbers = #tpu.dot_dimension_numbers<[1], [0], [0], [1], [0, 0, 1, 1], [], []>} : vector<8x8xbf16>, vector<8x8xbf16>, vector<8x8xf32> -> vector<8x8xf32>
    %c0_24 = arith.constant 0 : index
    %c0_25 = arith.constant 0 : index
    %47 = vector.load %arg15[%c0_24, %c0_25] : memref<8x32xf32, #tpu.memory_space<vmem>>, vector<8x32xf32>
    %48 = arith.truncf %46 : vector<8x8xf32> to vector<8x8xbf16>
    %c0_26 = arith.constant 0 : index
    %c0_27 = arith.constant 0 : index
    %c0_28 = arith.constant 0 : index
    %49 = vector.load %arg11[%c0_26, %c0_27, %c0_28] : memref<1x8x32xbf16, #tpu.memory_space<vmem>>, vector<1x8x32xbf16>
    %50 = vector.shape_cast %49 : vector<1x8x32xbf16> to vector<8x32xbf16>
    %cst_29 = arith.constant dense<0.000000e+00> : vector<8x32xf32>
    %51 = tpu.matmul %48, %50, %cst_29 {dimension_numbers = #tpu.dot_dimension_numbers<[1], [0], [0], [1], [0, 0, 1, 1], [], []>} : vector<8x8xbf16>, vector<8x32xbf16>, vector<8x32xf32> -> vector<8x32xf32>
    %52 = arith.addf %47, %51 : vector<8x32xf32>
    %c0_30 = arith.constant 0 : index
    %c0_31 = arith.constant 0 : index
    %53 = vector.load %arg15[%c0_30, %c0_31] : memref<8x32xf32, #tpu.memory_space<vmem>>, vector<8x32xf32>
    tpu.vector_store %arg15[%c0_30, %c0_31], %52 {strides = array<i32>} : memref<8x32xf32, #tpu.memory_space<vmem>>, vector<8x32xf32>,
    %c3_i32 = arith.constant 3 : i32
    %54 = arith.cmpi eq, %arg2, %c3_i32 : i32
    %55 = arith.extui %54 : i1 to i32
    %c0_i32_32 = arith.constant 0 : i32
    %56 = arith.cmpi ne, %55, %c0_i32_32 : i32
    scf.if %56 {
      %c0_33 = arith.constant 0 : index
      %c0_34 = arith.constant 0 : index
      %57 = vector.load %arg15[%c0_33, %c0_34] : memref<8x32xf32, #tpu.memory_space<vmem>>, vector<8x32xf32>
      %c0_35 = arith.constant 0 : index
      %c0_36 = arith.constant 0 : index
      %58 = vector.load %arg12[%c0_35, %c0_36] : memref<1x32xf32, #tpu.memory_space<vmem>>, vector<1x32xf32>
      %59 = vector.broadcast %58 : vector<1x32xf32> to vector<8x32xf32>
      %60 = arith.addf %57, %59 : vector<8x32xf32>
      %c0_37 = arith.constant 0 : index
      %c0_38 = arith.constant 0 : index
      %c0_39 = arith.constant 0 : index
      %61 = vector.load %arg13[%c0_37, %c0_38, %c0_39] : memref<1x8x32xf32, #tpu.memory_space<vmem>>, vector<1x8x32xf32>
      %62 = vector.shape_cast %61 : vector<1x8x32xf32> to vector<8x32xf32>
      %63 = vector.shape_cast %60 : vector<8x32xf32> to vector<1x8x32xf32>
      tpu.vector_store %arg13[%c0_37, %c0_38, %c0_39], %63 {strides = array<i32>} : memref<1x8x32xf32, #tpu.memory_space<vmem>>, vector<1x8x32xf32>,
    } else {
    }
    return
  }
  func.func @transform_0(%arg0: i32, %arg1: i32, %arg2: i32) -> (i32, i32, i32) {
    %c0_i32 = arith.constant 0 : i32
    %c0_i32_0 = arith.constant 0 : i32
    return %arg0, %arg1, %c0_i32 : i32, i32, i32
  }
  func.func @transform_1(%arg0: i32, %arg1: i32, %arg2: i32) -> (i32, i32, i32) {
    %c0_i32 = arith.constant 0 : i32
    %c0_i32_0 = arith.constant 0 : i32
    %c0_i32_1 = arith.constant 0 : i32
    return %arg0, %c0_i32, %c0_i32_0 : i32, i32, i32
  }
  func.func @transform_2(%arg0: i32, %arg1: i32, %arg2: i32) -> (i32, i32, i32) {
    %c0_i32 = arith.constant 0 : i32
    %c0_i32_0 = arith.constant 0 : i32
    %c0_i32_1 = arith.constant 0 : i32
    return %arg2, %c0_i32, %c0_i32_0 : i32, i32, i32
  }
  func.func @transform_3(%arg0: i32, %arg1: i32, %arg2: i32) -> (i32, i32, i32) {
    %c0_i32 = arith.constant 0 : i32
    %c0_i32_0 = arith.constant 0 : i32
    %c0_i32_1 = arith.constant 0 : i32
    return %arg2, %c0_i32, %c0_i32_0 : i32, i32, i32
  }
  func.func @transform_4(%arg0: i32, %arg1: i32, %arg2: i32) -> (i32, i32, i32) {
    %c0_i32 = arith.constant 0 : i32
    %c0_i32_0 = arith.constant 0 : i32
    %c0_i32_1 = arith.constant 0 : i32
    return %arg2, %c0_i32, %c0_i32_0 : i32, i32, i32
  }
  func.func @transform_5(%arg0: i32, %arg1: i32, %arg2: i32) -> (i32, i32, i32) {
    %c0_i32 = arith.constant 0 : i32
    %c0_i32_0 = arith.constant 0 : i32
    %c0_i32_1 = arith.constant 0 : i32
    return %arg2, %c0_i32, %c0_i32_0 : i32, i32, i32
  }
  func.func @transform_6(%arg0: i32, %arg1: i32, %arg2: i32) -> (i32, i32, i32) {
    %c0_i32 = arith.constant 0 : i32
    %c0_i32_0 = arith.constant 0 : i32
    %c0_i32_1 = arith.constant 0 : i32
    return %arg2, %c0_i32, %c0_i32_0 : i32, i32, i32
  }
  func.func @transform_7(%arg0: i32, %arg1: i32, %arg2: i32) -> (i32, i32, i32) {
    %c0_i32 = arith.constant 0 : i32
    %c0_i32_0 = arith.constant 0 : i32
    %c0_i32_1 = arith.constant 0 : i32
    return %arg2, %c0_i32, %c0_i32_0 : i32, i32, i32
  }
  func.func @transform_8(%arg0: i32, %arg1: i32, %arg2: i32) -> (i32, i32, i32) {
    %c0_i32 = arith.constant 0 : i32
    %c0_i32_0 = arith.constant 0 : i32
    %c0_i32_1 = arith.constant 0 : i32
    return %arg2, %c0_i32, %c0_i32_0 : i32, i32, i32
  }
  func.func @transform_9(%arg0: i32, %arg1: i32, %arg2: i32) -> (i32, i32) {
    %c0_i32 = arith.constant 0 : i32
    %c0_i32_0 = arith.constant 0 : i32
    %c0_i32_1 = arith.constant 0 : i32
    return %c0_i32, %c0_i32_0 : i32, i32
  }
  func.func @transform_10(%arg0: i32, %arg1: i32, %arg2: i32) -> (i32, i32, i32) {
    %c0_i32 = arith.constant 0 : i32
    %c0_i32_0 = arith.constant 0 : i32
    return %arg0, %arg1, %c0_i32 : i32, i32, i32
  }
  func.func @transform_11(%arg0: i32, %arg1: i32, %arg2: i32) -> (i32, i32, i32, i32) {
    %c0_i32 = arith.constant 0 : i32
    %c0_i32_0 = arith.constant 0 : i32
    return %arg0, %arg2, %arg1, %c0_i32 : i32, i32, i32, i32
  }
}

</mosaic_0001>

<llo_original>
// kernel: tpu_custom_call.1
$region0: #{tpu_custom_call.1}
  #allocation0 [shape = 'u32[]', space=smem, size = 0x4, offset = 0x4, fixed_abs, tag = 'smem constant byte address 0x4 - core index']
  #allocation1 [shape = 'u32[144,128]{1,0:T(1,128)}', space=vmem, size = 0x12000, scoped, tag = 'internal scratch']
  #allocation2 [shape = 'f32[8,32]{1,0:T(8,128)}', space=vmem, size = 0x1000, scoped, tag = 'scratch operand']
  #allocation3 [shape = 'bf16[4,8,8]{2,1,0:T(8,128)(2,1)}', space=vmem, size = 0x2000, scoped, tag = 'scratch operand']
  #allocation4 [shape = 'bf16[4,8,8]{2,1,0:T(8,128)(2,1)}', space=vmem, size = 0x2000, scoped, tag = 'scratch operand']
  %s0 = inlined_call_operand.vmem [shape: f32[2,8,32], index: 0, kind: input, shape index: {}]
  %s1 = inlined_call_operand.vmem [shape: f32[2,8,32], index: 1, kind: input, shape index: {}]
  %s2 = inlined_call_operand.vmem [shape: bf16[4,32,8], index: 2, kind: input, shape index: {}]
  %s3 = inlined_call_operand.vmem [shape: f32[4,1,8], index: 3, kind: input, shape index: {}]
  %s4 = inlined_call_operand.vmem [shape: bf16[4,32,8], index: 4, kind: input, shape index: {}]
  %s5 = inlined_call_operand.vmem [shape: f32[4,1,8], index: 5, kind: input, shape index: {}]
  %s6 = inlined_call_operand.vmem [shape: bf16[4,32,8], index: 6, kind: input, shape index: {}]
  %s7 = inlined_call_operand.vmem [shape: f32[4,1,8], index: 7, kind: input, shape index: {}]
  %s8 = inlined_call_operand.vmem [shape: bf16[4,8,32], index: 8, kind: input, shape index: {}]
  %s9 = inlined_call_operand.vmem [shape: f32[1,32], index: 9, kind: input, shape index: {}]
  %s10 = inlined_call_operand.hbm [shape: f32[2,8,32], index: 10, kind: output, shape index: {0}]
  %s11 = inlined_call_operand.hbm [shape: f32[2,4,8,8], index: 11, kind: output, shape index: {1}]
  %12 = xla_tuple %s10, %s11
  %s13 = sld [smem:[#allocation0]]
  $region93: #{tpu_custom_call.1} parent=0
    _
  %s15 = ssub.s32 1, %s13
  %s16 = scalar_select 0, %s15, %s13
  $region1: #{tpu_custom_call.1} parent=0
    #allocation5 [shape = 'u8[8192]{0}', space=vmem, size = 0x2000, scoped, tag = 'output window, operand 0']
    #allocation6 [shape = 's32[2]{0}', space=sflag, size = 0x8, scoped, tag = 'scoped memory for tpu_custom_call.1']
    #allocation7 [shape = 'u8[8192]{0}', space=vmem, size = 0x2000, scoped, tag = 'output window, operand 1']
    #allocation8 [shape = 's32[2]{0}', space=sflag, size = 0x8, scoped, tag = 'scoped memory for tpu_custom_call.1']
    %17 = vsyncpa [#allocation6], 0
    %s18 = scalar_lea.sflag [#allocation6], 1
    %19 = vsyncpa %s18, 0
    %20 = vsyncpa [#allocation8], 0
    %s21 = scalar_lea.sflag [#allocation8], 1
    %22 = vsyncpa %s21, 0
    loop: start=0, step=1, limit=10
    $region2: #{tpu_custom_call.1} parent=1 // loop_pre_header
      _
    $region3: #{tpu_custom_call.1} parent=1 // loop_header
      %s24 = sphi 0, %s28
      %p25 = scmp.ge.s32.totalorder %s24, 10
      %s31 = sphi 0, %s50
      %s32 = sphi 0, %s46
      %s33 = sphi 0, %s42
      %s34 = sphi 0, %s31
      %s35 = sphi 0, %s32
      %s36 = sphi 0, %s33
      %s37 = sphi 0, %s34
      %s38 = sphi 0, %s35
      %s39 = sphi 0, %s36
      %s55 = sphi 0, %s57
      %s58 = sphi 0, %s55
      %s59 = sphi 0, %s58
      %s75 = sphi 0, %s59
      %s81 = sphi 0, %s83
      %s84 = sphi 0, %s81
      %s85 = sphi 0, %s84
      %s101 = sphi 0, %s85
      %s107 = sphi 0, %s109
      %s110 = sphi 0, %s107
      %s111 = sphi 0, %s110
      %s127 = sphi 0, %s111
      %s133 = sphi 0, %s135
      %s136 = sphi 0, %s133
      %s137 = sphi 0, %s136
      %s153 = sphi 0, %s137
      %s159 = sphi 0, %s161
      %s162 = sphi 0, %s159
      %s163 = sphi 0, %s162
      %s179 = sphi 0, %s163
      %s185 = sphi 0, %s187
      %s188 = sphi 0, %s185
      %s189 = sphi 0, %s188
      %s205 = sphi 0, %s189
      %s211 = sphi 0, %s213
      %s214 = sphi 0, %s211
      %s215 = sphi 0, %s214
      %s231 = sphi 0, %s215
      %s237 = sphi 0, %s239
      %s240 = sphi 0, %s237
      %s241 = sphi 0, %s240
      %s257 = sphi 0, %s241
      %s263 = sphi 0, %s265
      %s266 = sphi 0, %s263
      %s267 = sphi 0, %s266
      %s283 = sphi 0, %s267
      %s287 = sphi 0, %s287
      %s289 = sphi 0, %s287
      %s290 = sphi 0, %s289
      %s304 = sphi 0, %s290
      %s312 = sphi 0, %s314
      %s315 = sphi 0, %s312
      %s316 = sphi 0, %s315
      %s332 = sphi 0, %s316
      %s342 = sphi 0, %s344
      %s345 = sphi 0, %s342
      %s346 = sphi 0, %s345
      %s362 = sphi 0, %s346
    $region4: #{tpu_custom_call.1} parent=1 // loop_header_branch
      %27 = sbr.rel (%p25) target = $region8
    $region5: #{tpu_custom_call.1} parent=1 // loop_body
      %s29 = ssub.s32 %s24, 1
      %s30 = ssub.s32 %s24, 2
      %s40 = sadd.s32 1, %s33
      %p41 = scmp.ge.s32.totalorder %s40, 4
      %s42 = scalar_select %p41, 0, %s40
      %s43 = sadd.s32 1, %s32
      %s44 = scalar_select %p41, %s43, %s32
      %p45 = scmp.ge.s32.totalorder %s44, 1
      %s46 = scalar_select %p45, 0, %s44
      %s47 = sadd.s32 1, %s31
      %s48 = scalar_select %p45, %s47, %s31
      %p49 = scmp.ge.s32.totalorder %s48, 2
      %s50 = scalar_select %p49, 0, %s48
      %s51 = ssub.s32 %s31, %s50
      %s52 = ssub.s32 %s32, %s46
      %s53 = sor.u32 %s51, %s52
      %p54 = scmp.eq.s32.totalorder %s53, 0
      %s56 = sadd.s32 %s55, 1
      %s57 = scalar_select %p54, %s55, %s56
      %p60 = pneg %p54
      %p61 = scmp.eq.s32.totalorder %s24, 7
      %p62 = por %p60, %p61
      %p63 = scmp.ne.s32.totalorder %s55, %s58
      %p64 = scmp.eq.s32.totalorder %s24, 0
      %p65 = por %p63, %p64
      %p66 = scmp.ne.s32.totalorder %s55, %s58
      %p67 = scmp.eq.s32.totalorder %s29, 7
      %p68 = por %p66, %p67
      %p69 = scmp.ne.s32.totalorder %s58, %s59
      %p70 = scmp.eq.s32.totalorder %s29, 0
      %p71 = por %p69, %p70
      %p72 = scmp.ne.s32.totalorder %s58, %s59
      %p73 = scmp.eq.s32.totalorder %s30, 7
      %p74 = por %p72, %p73
      %p76 = scmp.ne.s32.totalorder %s59, %s75
      %p77 = scmp.eq.s32.totalorder %s30, 0
      %p78 = por %p76, %p77
      %s79 = ssub.s32 %s31, %s50
      %p80 = scmp.eq.s32.totalorder %s79, 0
      %s82 = sadd.s32 %s81, 1
      %s83 = scalar_select %p80, %s81, %s82
      %p86 = pneg %p80
      %p87 = scmp.eq.s32.totalorder %s24, 7
      %p88 = por %p86, %p87
      %p89 = scmp.ne.s32.totalorder %s81, %s84
      %p90 = scmp.eq.s32.totalorder %s24, 0
      %p91 = por %p89, %p90
      %p92 = scmp.ne.s32.totalorder %s81, %s84
      %p93 = scmp.eq.s32.totalorder %s29, 7
      %p94 = por %p92, %p93
      %p95 = scmp.ne.s32.totalorder %s84, %s85
      %p96 = scmp.eq.s32.totalorder %s29, 0
      %p97 = por %p95, %p96
      %p98 = scmp.ne.s32.totalorder %s84, %s85
      %p99 = scmp.eq.s32.totalorder %s30, 7
      %p100 = por %p98, %p99
      %p102 = scmp.ne.s32.totalorder %s85, %s101
      %p103 = scmp.eq.s32.totalorder %s30, 0
      %p104 = por %p102, %p103
      %s105 = ssub.s32 %s33, %s42
      %p106 = scmp.eq.s32.totalorder %s105, 0
      %s108 = sadd.s32 %s107, 1
      %s109 = scalar_select %p106, %s107, %s108
      %p112 = pneg %p106
      %p113 = scmp.eq.s32.totalorder %s24, 7
      %p114 = por %p112, %p113
      %p115 = scmp.ne.s32.totalorder %s107, %s110
      %p116 = scmp.eq.s32.totalorder %s24, 0
      %p117 = por %p115, %p116
      %p118 = scmp.ne.s32.totalorder %s107, %s110
      %p119 = scmp.eq.s32.totalorder %s29, 7
      %p120 = por %p118, %p119
      %p121 = scmp.ne.s32.totalorder %s110, %s111
      %p122 = scmp.eq.s32.totalorder %s29, 0
      %p123 = por %p121, %p122
      %p124 = scmp.ne.s32.totalorder %s110, %s111
      %p125 = scmp.eq.s32.totalorder %s30, 7
      %p126 = por %p124, %p125
      %p128 = scmp.ne.s32.totalorder %s111, %s127
      %p129 = scmp.eq.s32.totalorder %s30, 0
      %p130 = por %p128, %p129
      %s131 = ssub.s32 %s33, %s42
      %p132 = scmp.eq.s32.totalorder %s131, 0
      %s134 = sadd.s32 %s133, 1
      %s135 = scalar_select %p132, %s133, %s134
      %p138 = pneg %p132
      %p139 = scmp.eq.s32.totalorder %s24, 7
      %p140 = por %p138, %p139
      %p141 = scmp.ne.s32.totalorder %s133, %s136
      %p142 = scmp.eq.s32.totalorder %s24, 0
      %p143 = por %p141, %p142
      %p144 = scmp.ne.s32.totalorder %s133, %s136
      %p145 = scmp.eq.s32.totalorder %s29, 7
      %p146 = por %p144, %p145
      %p147 = scmp.ne.s32.totalorder %s136, %s137
      %p148 = scmp.eq.s32.totalorder %s29, 0
      %p149 = por %p147, %p148
      %p150 = scmp.ne.s32.totalorder %s136, %s137
      %p151 = scmp.eq.s32.totalorder %s30, 7
      %p152 = por %p150, %p151
      %p154 = scmp.ne.s32.totalorder %s137, %s153
      %p155 = scmp.eq.s32.totalorder %s30, 0
      %p156 = por %p154, %p155
      %s157 = ssub.s32 %s33, %s42
      %p158 = scmp.eq.s32.totalorder %s157, 0
      %s160 = sadd.s32 %s159, 1
      %s161 = scalar_select %p158, %s159, %s160
      %p164 = pneg %p158
      %p165 = scmp.eq.s32.totalorder %s24, 7
      %p166 = por %p164, %p165
      %p167 = scmp.ne.s32.totalorder %s159, %s162
      %p168 = scmp.eq.s32.totalorder %s24, 0
      %p169 = por %p167, %p168
      %p170 = scmp.ne.s32.totalorder %s159, %s162
      %p171 = scmp.eq.s32.totalorder %s29, 7
      %p172 = por %p170, %p171
      %p173 = scmp.ne.s32.totalorder %s162, %s163
      %p174 = scmp.eq.s32.totalorder %s29, 0
      %p175 = por %p173, %p174
      %p176 = scmp.ne.s32.totalorder %s162, %s163
      %p177 = scmp.eq.s32.totalorder %s30, 7
      %p178 = por %p176, %p177
      %p180 = scmp.ne.s32.totalorder %s163, %s179
      %p181 = scmp.eq.s32.totalorder %s30, 0
      %p182 = por %p180, %p181
      %s183 = ssub.s32 %s33, %s42
      %p184 = scmp.eq.s32.totalorder %s183, 0
      %s186 = sadd.s32 %s185, 1
      %s187 = scalar_select %p184, %s185, %s186
      %p190 = pneg %p184
      %p191 = scmp.eq.s32.totalorder %s24, 7
      %p192 = por %p190, %p191
      %p193 = scmp.ne.s32.totalorder %s185, %s188
      %p194 = scmp.eq.s32.totalorder %s24, 0
      %p195 = por %p193, %p194
      %p196 = scmp.ne.s32.totalorder %s185, %s188
      %p197 = scmp.eq.s32.totalorder %s29, 7
      %p198 = por %p196, %p197
      %p199 = scmp.ne.s32.totalorder %s188, %s189
      %p200 = scmp.eq.s32.totalorder %s29, 0
      %p201 = por %p199, %p200
      %p202 = scmp.ne.s32.totalorder %s188, %s189
      %p203 = scmp.eq.s32.totalorder %s30, 7
      %p204 = por %p202, %p203
      %p206 = scmp.ne.s32.totalorder %s189, %s205
      %p207 = scmp.eq.s32.totalorder %s30, 0
      %p208 = por %p206, %p207
      %s209 = ssub.s32 %s33, %s42
      %p210 = scmp.eq.s32.totalorder %s209, 0
      %s212 = sadd.s32 %s211, 1
      %s213 = scalar_select %p210, %s211, %s212
      %p216 = pneg %p210
      %p217 = scmp.eq.s32.totalorder %s24, 7
      %p218 = por %p216, %p217
      %p219 = scmp.ne.s32.totalorder %s211, %s214
      %p220 = scmp.eq.s32.totalorder %s24, 0
      %p221 = por %p219, %p220
      %p222 = scmp.ne.s32.totalorder %s211, %s214
      %p223 = scmp.eq.s32.totalorder %s29, 7
      %p224 = por %p222, %p223
      %p225 = scmp.ne.s32.totalorder %s214, %s215
      %p226 = scmp.eq.s32.totalorder %s29, 0
      %p227 = por %p225, %p226
      %p228 = scmp.ne.s32.totalorder %s214, %s215
      %p229 = scmp.eq.s32.totalorder %s30, 7
      %p230 = por %p228, %p229
      %p232 = scmp.ne.s32.totalorder %s215, %s231
      %p233 = scmp.eq.s32.totalorder %s30, 0
      %p234 = por %p232, %p233
      %s235 = ssub.s32 %s33, %s42
      %p236 = scmp.eq.s32.totalorder %s235, 0
      %s238 = sadd.s32 %s237, 1
      %s239 = scalar_select %p236, %s237, %s238
      %p242 = pneg %p236
      %p243 = scmp.eq.s32.totalorder %s24, 7
      %p244 = por %p242, %p243
      %p245 = scmp.ne.s32.totalorder %s237, %s240
      %p246 = scmp.eq.s32.totalorder %s24, 0
      %p247 = por %p245, %p246
      %p248 = scmp.ne.s32.totalorder %s237, %s240
      %p249 = scmp.eq.s32.totalorder %s29, 7
      %p250 = por %p248, %p249
      %p251 = scmp.ne.s32.totalorder %s240, %s241
      %p252 = scmp.eq.s32.totalorder %s29, 0
      %p253 = por %p251, %p252
      %p254 = scmp.ne.s32.totalorder %s240, %s241
      %p255 = scmp.eq.s32.totalorder %s30, 7
      %p256 = por %p254, %p255
      %p258 = scmp.ne.s32.totalorder %s241, %s257
      %p259 = scmp.eq.s32.totalorder %s30, 0
      %p260 = por %p258, %p259
      %s261 = ssub.s32 %s33, %s42
      %p262 = scmp.eq.s32.totalorder %s261, 0
      %s264 = sadd.s32 %s263, 1
      %s265 = scalar_select %p262, %s263, %s264
      %p268 = pneg %p262
      %p269 = scmp.eq.s32.totalorder %s24, 7
      %p270 = por %p268, %p269
      %p271 = scmp.ne.s32.totalorder %s263, %s266
      %p272 = scmp.eq.s32.totalorder %s24, 0
      %p273 = por %p271, %p272
      %p274 = scmp.ne.s32.totalorder %s263, %s266
      %p275 = scmp.eq.s32.totalorder %s29, 7
      %p276 = por %p274, %p275
      %p277 = scmp.ne.s32.totalorder %s266, %s267
      %p278 = scmp.eq.s32.totalorder %s29, 0
      %p279 = por %p277, %p278
      %p280 = scmp.ne.s32.totalorder %s266, %s267
      %p281 = scmp.eq.s32.totalorder %s30, 7
      %p282 = por %p280, %p281
      %p284 = scmp.ne.s32.totalorder %s267, %s283
      %p285 = scmp.eq.s32.totalorder %s30, 0
      %p286 = por %p284, %p285
      %s288 = sadd.s32 %s287, 1
      %p291 = scmp.eq.s32.totalorder %s24, 7
      %p292 = scmp.ne.s32.totalorder %s287, %s289
      %p293 = scmp.eq.s32.totalorder %s24, 0
      %p294 = por %p292, %p293
      %p295 = scmp.ne.s32.totalorder %s287, %s289
      %p296 = scmp.eq.s32.totalorder %s29, 7
      %p297 = por %p295, %p296
      %p298 = scmp.ne.s32.totalorder %s289, %s290
      %p299 = scmp.eq.s32.totalorder %s29, 0
      %p300 = por %p298, %p299
      %p301 = scmp.ne.s32.totalorder %s289, %s290
      %p302 = scmp.eq.s32.totalorder %s30, 7
      %p303 = por %p301, %p302
      %p305 = scmp.ne.s32.totalorder %s290, %s304
      %p306 = scmp.eq.s32.totalorder %s30, 0
      %p307 = por %p305, %p306
      %s308 = ssub.s32 %s31, %s50
      %s309 = ssub.s32 %s32, %s46
      %s310 = sor.u32 %s308, %s309
      %p311 = scmp.eq.s32.totalorder %s310, 0
      %s313 = sadd.s32 %s312, 1
      %s314 = scalar_select %p311, %s312, %s313
      %p317 = pneg %p311
      %p318 = scmp.eq.s32.totalorder %s24, 7
      %p319 = por %p317, %p318
      %p320 = scmp.ne.s32.totalorder %s312, %s315
      %p321 = scmp.eq.s32.totalorder %s24, 0
      %p322 = por %p320, %p321
      %p323 = scmp.ne.s32.totalorder %s312, %s315
      %p324 = scmp.eq.s32.totalorder %s29, 7
      %p325 = por %p323, %p324
      %p326 = scmp.ne.s32.totalorder %s315, %s316
      %p327 = scmp.eq.s32.totalorder %s29, 0
      %p328 = por %p326, %p327
      %p329 = scmp.ne.s32.totalorder %s315, %s316
      %p330 = scmp.eq.s32.totalorder %s30, 7
      %p331 = por %p329, %p330
      %p333 = scmp.ne.s32.totalorder %s316, %s332
      %p334 = scmp.eq.s32.totalorder %s30, 0
      %p335 = por %p333, %p334
      %s336 = ssub.s32 %s31, %s50
      %s337 = ssub.s32 %s33, %s42
      %s338 = sor.u32 %s336, %s337
      %s339 = ssub.s32 %s32, %s46
      %s340 = sor.u32 %s338, %s339
      %p341 = scmp.eq.s32.totalorder %s340, 0
      %s343 = sadd.s32 %s342, 1
      %s344 = scalar_select %p341, %s342, %s343
      %p347 = pneg %p341
      %p348 = scmp.eq.s32.totalorder %s24, 7
      %p349 = por %p347, %p348
      %p350 = scmp.ne.s32.totalorder %s342, %s345
      %p351 = scmp.eq.s32.totalorder %s24, 0
      %p352 = por %p350, %p351
      %p353 = scmp.ne.s32.totalorder %s342, %s345
      %p354 = scmp.eq.s32.totalorder %s29, 7
      %p355 = por %p353, %p354
      %p356 = scmp.ne.s32.totalorder %s345, %s346
      %p357 = scmp.eq.s32.totalorder %s29, 0
      %p358 = por %p356, %p357
      %p359 = scmp.ne.s32.totalorder %s345, %s346
      %p360 = scmp.eq.s32.totalorder %s30, 7
      %p361 = por %p359, %p360
      %p363 = scmp.ne.s32.totalorder %s346, %s362
      %p364 = scmp.eq.s32.totalorder %s30, 0
      %p365 = por %p363, %p364
      %p366 = scmp.le.s32.totalorder 1, %s24
      %p367 = scmp.lt.s32.totalorder %s24, 9
      %p368 = pnand %p366, %p367
      %p369 = pneg %p368
      // Predicated region
      $region9: #{tpu_custom_call.1} parent=5 // pred_check
        _
      $region10: #{tpu_custom_call.1} parent=5 // pred_check_branch
        %371 = sbr.rel (%p368) target = $region12
      $region11: #{tpu_custom_call.1} parent=5 // pred_region
        %s372 = ssub.s32 %s24, 1
        // Predicated region
        $region13: #{tpu_custom_call.1} parent=11 // pred_check
          %p373 = pneg %p300
        $region14: #{tpu_custom_call.1} parent=11 // pred_check_branch
          %375 = sbr.rel (%p373) target = $region16
        $region15: #{tpu_custom_call.1} parent=11 // pred_region
          _
        $region16: #{tpu_custom_call.1} parent=11 // pred_fallthru
          _
      $region12: #{tpu_custom_call.1} parent=5 // pred_fallthru
        _
      %p376 = scmp.lt.s32.totalorder %s24, 8
      // Predicated region
      $region17: #{tpu_custom_call.1} parent=5 // pred_check
        %p377 = pneg %p376
      $region18: #{tpu_custom_call.1} parent=5 // pred_check_branch
        %379 = sbr.rel (%p377) target = $region20
      $region19: #{tpu_custom_call.1} parent=5 // pred_region
        // Predicated region
        $region21: #{tpu_custom_call.1} parent=19 // pred_check
          %p380 = pneg %p65
        $region22: #{tpu_custom_call.1} parent=19 // pred_check_branch
          %382 = sbr.rel (%p380) target = $region24
        $region23: #{tpu_custom_call.1} parent=19 // pred_region
          %p383 = scmp.lt.s32.totalorder %s31, 1
          %s384 = scalar_select %p383, %s31, 1
          %p385 = scmp.lt.s32.totalorder %s32, 0
          %s386 = scalar_select %p385, %s32, 0
          %s387 = sadd.s32 %s386, %s384
          %s388 = smul.addr %s387, 8
          %s389 = scalar_lea.vmem %s0, %s388
        $region24: #{tpu_custom_call.1} parent=19 // pred_fallthru
          _
        // Predicated region
        $region25: #{tpu_custom_call.1} parent=19 // pred_check
          %p390 = pneg %p91
        $region26: #{tpu_custom_call.1} parent=19 // pred_check_branch
          %392 = sbr.rel (%p390) target = $region28
        $region27: #{tpu_custom_call.1} parent=19 // pred_region
          %p393 = scmp.lt.s32.totalorder %s31, 1
          %s394 = scalar_select %p393, %s31, 1
          %s395 = smul.addr %s394, 8
          %s396 = scalar_lea.vmem %s1, %s395
        $region28: #{tpu_custom_call.1} parent=19 // pred_fallthru
          _
        // Predicated region
        $region29: #{tpu_custom_call.1} parent=19 // pred_check
          %p397 = pneg %p117
        $region30: #{tpu_custom_call.1} parent=19 // pred_check_branch
          %399 = sbr.rel (%p397) target = $region32
        $region31: #{tpu_custom_call.1} parent=19 // pred_region
          %p400 = scmp.lt.s32.totalorder %s33, 3
          %s401 = scalar_select %p400, %s33, 3
          %s402 = smul.addr %s401, 4
          %s403 = smul.addr %s402, 4
          %s404 = scalar_lea.vmem %s2, %s403
        $region32: #{tpu_custom_call.1} parent=19 // pred_fallthru
          _
        // Predicated region
        $region33: #{tpu_custom_call.1} parent=19 // pred_check
          %p405 = pneg %p143
        $region34: #{tpu_custom_call.1} parent=19 // pred_check_branch
          %407 = sbr.rel (%p405) target = $region36
        $region35: #{tpu_custom_call.1} parent=19 // pred_region
          %p408 = scmp.lt.s32.totalorder %s33, 3
          %s409 = scalar_select %p408, %s33, 3
          %s410 = scalar_lea.vmem %s3, %s409
        $region36: #{tpu_custom_call.1} parent=19 // pred_fallthru
          _
        // Predicated region
        $region37: #{tpu_custom_call.1} parent=19 // pred_check
          %p411 = pneg %p169
        $region38: #{tpu_custom_call.1} parent=19 // pred_check_branch
          %413 = sbr.rel (%p411) target = $region40
        $region39: #{tpu_custom_call.1} parent=19 // pred_region
          %p414 = scmp.lt.s32.totalorder %s33, 3
          %s415 = scalar_select %p414, %s33, 3
          %s416 = smul.addr %s415, 4
          %s417 = smul.addr %s416, 4
          %s418 = scalar_lea.vmem %s4, %s417
        $region40: #{tpu_custom_call.1} parent=19 // pred_fallthru
          _
        // Predicated region
        $region41: #{tpu_custom_call.1} parent=19 // pred_check
          %p419 = pneg %p195
        $region42: #{tpu_custom_call.1} parent=19 // pred_check_branch
          %421 = sbr.rel (%p419) target = $region44
        $region43: #{tpu_custom_call.1} parent=19 // pred_region
          %p422 = scmp.lt.s32.totalorder %s33, 3
          %s423 = scalar_select %p422, %s33, 3
          %s424 = scalar_lea.vmem %s5, %s423
        $region44: #{tpu_custom_call.1} parent=19 // pred_fallthru
          _
        // Predicated region
        $region45: #{tpu_custom_call.1} parent=19 // pred_check
          %p425 = pneg %p221
        $region46: #{tpu_custom_call.1} parent=19 // pred_check_branch
          %427 = sbr.rel (%p425) target = $region48
        $region47: #{tpu_custom_call.1} parent=19 // pred_region
          %p428 = scmp.lt.s32.totalorder %s33, 3
          %s429 = scalar_select %p428, %s33, 3
          %s430 = smul.addr %s429, 4
          %s431 = smul.addr %s430, 4
          %s432 = scalar_lea.vmem %s6, %s431
        $region48: #{tpu_custom_call.1} parent=19 // pred_fallthru
          _
        // Predicated region
        $region49: #{tpu_custom_call.1} parent=19 // pred_check
          %p433 = pneg %p247
        $region50: #{tpu_custom_call.1} parent=19 // pred_check_branch
          %435 = sbr.rel (%p433) target = $region52
        $region51: #{tpu_custom_call.1} parent=19 // pred_region
          %p436 = scmp.lt.s32.totalorder %s33, 3
          %s437 = scalar_select %p436, %s33, 3
          %s438 = scalar_lea.vmem %s7, %s437
        $region52: #{tpu_custom_call.1} parent=19 // pred_fallthru
          _
        // Predicated region
        $region53: #{tpu_custom_call.1} parent=19 // pred_check
          %p439 = pneg %p273
        $region54: #{tpu_custom_call.1} parent=19 // pred_check_branch
          %441 = sbr.rel (%p439) target = $region56
        $region55: #{tpu_custom_call.1} parent=19 // pred_region
          %p442 = scmp.lt.s32.totalorder %s33, 3
          %s443 = scalar_select %p442, %s33, 3
          %s444 = smul.addr %s443, 4
          %s445 = scalar_lea.vmem %s8, %s444
        $region56: #{tpu_custom_call.1} parent=19 // pred_fallthru
          _
      $region20: #{tpu_custom_call.1} parent=5 // pred_fallthru
        _
      %p446 = scmp.le.s32.totalorder 1, %s24
      %p447 = scmp.lt.s32.totalorder %s24, 9
      %p448 = pnand %p446, %p447
      %p449 = pneg %p448
      // Predicated region
      $region57: #{tpu_custom_call.1} parent=5 // pred_check
        _
      $region58: #{tpu_custom_call.1} parent=5 // pred_check_branch
        %451 = sbr.rel (%p448) target = $region60
      $region59: #{tpu_custom_call.1} parent=5 // pred_region
        %s452 = ssub.s32 %s24, 1
        %p453 = scmp.lt.s32.totalorder %s34, 1
        %s454 = scalar_select %p453, %s34, 1
        %p455 = scmp.lt.s32.totalorder %s35, 0
        %s456 = scalar_select %p455, %s35, 0
        %s457 = sadd.s32 %s456, %s454
        %s458 = smul.addr %s457, 8
        %s459 = scalar_lea.vmem %s0, %s458
        %p460 = pneg %p71
        %p461 = pneg %p68
        %p462 = scmp.lt.s32.totalorder %s34, 1
        %s463 = scalar_select %p462, %s34, 1
        %s464 = smul.addr %s463, 8
        %s465 = scalar_lea.vmem %s1, %s464
        %p466 = pneg %p97
        %p467 = pneg %p94
        %p468 = scmp.lt.s32.totalorder %s36, 3
        %s469 = scalar_select %p468, %s36, 3
        %s470 = smul.addr %s469, 4
        %s471 = smul.addr %s470, 4
        %s472 = scalar_lea.vmem %s2, %s471
        %p473 = pneg %p123
        %p474 = pneg %p120
        %p475 = scmp.lt.s32.totalorder %s36, 3
        %s476 = scalar_select %p475, %s36, 3
        %s477 = scalar_lea.vmem %s3, %s476
        %p478 = pneg %p149
        %p479 = pneg %p146
        %p480 = scmp.lt.s32.totalorder %s36, 3
        %s481 = scalar_select %p480, %s36, 3
        %s482 = smul.addr %s481, 4
        %s483 = smul.addr %s482, 4
        %s484 = scalar_lea.vmem %s4, %s483
        %p485 = pneg %p175
        %p486 = pneg %p172
        %p487 = scmp.lt.s32.totalorder %s36, 3
        %s488 = scalar_select %p487, %s36, 3
        %s489 = scalar_lea.vmem %s5, %s488
        %p490 = pneg %p201
        %p491 = pneg %p198
        %p492 = scmp.lt.s32.totalorder %s36, 3
        %s493 = scalar_select %p492, %s36, 3
        %s494 = smul.addr %s493, 4
        %s495 = smul.addr %s494, 4
        %s496 = scalar_lea.vmem %s6, %s495
        %p497 = pneg %p227
        %p498 = pneg %p224
        %p499 = scmp.lt.s32.totalorder %s36, 3
        %s500 = scalar_select %p499, %s36, 3
        %s501 = scalar_lea.vmem %s7, %s500
        %p502 = pneg %p253
        %p503 = pneg %p250
        %p504 = scmp.lt.s32.totalorder %s36, 3
        %s505 = scalar_select %p504, %s36, 3
        %s506 = smul.addr %s505, 4
        %s507 = scalar_lea.vmem %s8, %s506
        %p508 = pneg %p279
        %p509 = pneg %p276
        %p510 = pneg %p300
        %p511 = pneg %p297
        %p512 = pneg %p328
        %p513 = pneg %p325
        %s514 = sand.u32 %s315, 1
        %s515 = scalar_lea.sflag [#allocation6], %s514
        %s516 = sand.u32 %s315, 1
        %s517 = smul.addr %s516, 8
        %s518 = scalar_lea.vmem [#allocation5], %s517
        %p519 = pneg %p358
        %p520 = pneg %p355
        %s521 = sand.u32 %s345, 1
        %s522 = scalar_lea.sflag [#allocation8], %s521
        %s523 = sand.u32 %s345, 1
        %s524 = smul.addr %s523, 8
        %s525 = scalar_lea.vmem [#allocation7], %s524
        %p526 = scmp.lt.s32.totalorder %s34, 1
        %s527 = scalar_select %p526, %s34, 1
        %p528 = scmp.lt.s32.totalorder %s35, 0
        %s529 = scalar_select %p528, %s35, 0
        %s530 = sadd.s32 %s529, %s527
        %s531 = smul.addr %s530, 8
        %s532 = scalar_lea.vmem %s0, %s531
        %p533 = scmp.lt.s32.totalorder %s34, 1
        %s534 = scalar_select %p533, %s34, 1
        %s535 = smul.addr %s534, 8
        %s536 = scalar_lea.vmem %s1, %s535
        %p537 = scmp.lt.s32.totalorder %s36, 3
        %s538 = scalar_select %p537, %s36, 3
        %s539 = smul.addr %s538, 4
        %s540 = smul.addr %s539, 4
        %s541 = scalar_lea.vmem %s2, %s540
        %p542 = scmp.lt.s32.totalorder %s36, 3
        %s543 = scalar_select %p542, %s36, 3
        %s544 = scalar_lea.vmem %s3, %s543
        %p545 = scmp.lt.s32.totalorder %s36, 3
        %s546 = scalar_select %p545, %s36, 3
        %s547 = smul.addr %s546, 4
        %s548 = smul.addr %s547, 4
        %s549 = scalar_lea.vmem %s4, %s548
        %p550 = scmp.lt.s32.totalorder %s36, 3
        %s551 = scalar_select %p550, %s36, 3
        %s552 = scalar_lea.vmem %s5, %s551
        %p553 = scmp.lt.s32.totalorder %s36, 3
        %s554 = scalar_select %p553, %s36, 3
        %s555 = smul.addr %s554, 4
        %s556 = smul.addr %s555, 4
        %s557 = scalar_lea.vmem %s6, %s556
        %p558 = scmp.lt.s32.totalorder %s36, 3
        %s559 = scalar_select %p558, %s36, 3
        %s560 = scalar_lea.vmem %s7, %s559
        %p561 = scmp.lt.s32.totalorder %s36, 3
        %s562 = scalar_select %p561, %s36, 3
        %s563 = smul.addr %s562, 4
        %s564 = scalar_lea.vmem %s8, %s563
        %p566 = scmp.eq.s32.totalorder %s35, 0
        // Predicated region
        $region61: #{tpu_custom_call.1} parent=59 // pred_check
          %p567 = pneg %p566
        $region62: #{tpu_custom_call.1} parent=59 // pred_check_branch
          %569 = sbr.rel (%p567) target = $region64
        $region63: #{tpu_custom_call.1} parent=59 // pred_region
          %v570 = vld [vmem:[%s536] sm:$0xff]
          %v571 = vpack.c.bf16 %v570, %v570
          %v572 = vld [vmem:[%s549] sm:$0xf]
          %v573 = vld [vmem:[%s549 + $0x4] sm:$0xf]
          %v574 = vld [vmem:[%s549 + $0x8] sm:$0xf]
          %v575 = vld [vmem:[%s549 + $0xc] sm:$0xf]
          %v576 = vld [vmem:[%s552] sm:$0x1]
          %v578 = vlaneseq
          %v579 = vshrl.u32 %v578, 7
          %v580 = vsub.s32 0, %v579
          %v581 = vrot.slane %v576, %v580
          %v587 = vunpack.c.l.b16 %v572
          %v588 = vunpack.c.l.b16 %v573
          %v589 = vunpack.c.l.b16 %v574
          %v590 = vunpack.c.l.b16 %v575
          %v591 = vpack.c.b16 %v588, %v587
          %v592 = vpack.c.b16 %v590, %v589
          %vm595 = vcmask 261120
          %v597 = vsel %vm595, %v571, 0
          %599 = vmatprep.subr.bf16.mxu0 0
          %600 = vmatpush1.bf16.msra.mxu0 %v591
          %601 = vmatprep.subr.bf16.mxu0 0
          %602 = vmatpush1.bf16.msra.mxu0 %v592
          %603 = vmatprep.subr.bf16.mxu0 0
          %604 = vmatpush1.bf16.msra.mxu0 0
          %605 = vmatprep.subr.bf16.mxu0 0
          %606 = vmatpush1.bf16.msra.mxu0 0
          %607 = vmatprep.subr.bf16.mxu0 0
          %608 = vmatpush1.bf16.msra.mxu0 0
          %609 = vmatprep.subr.bf16.mxu0 0
          %610 = vmatpush1.bf16.msra.mxu0 0
          %611 = vmatprep.subr.bf16.mxu0 0
          %612 = vmatpush1.bf16.msra.mxu0 0
          %613 = vmatprep.subr.bf16.mxu0 0
          %614 = vmatpush1.bf16.msra.mxu0 0
          %615 = vmatprep.subr.bf16.mxu0 0
          %616 = vmatpush1.bf16.msra.mxu0 0
          %617 = vmatprep.subr.bf16.mxu0 0
          %618 = vmatpush1.bf16.msra.mxu0 0
          %619 = vmatprep.subr.bf16.mxu0 0
          %620 = vmatpush1.bf16.msra.mxu0 0
          %621 = vmatprep.subr.bf16.mxu0 0
          %622 = vmatpush1.bf16.msra.mxu0 0
          %623 = vmatprep.subr.bf16.mxu0 0
          %624 = vmatpush1.bf16.msra.mxu0 0
          %625 = vmatprep.subr.bf16.mxu0 0
          %626 = vmatpush1.bf16.msra.mxu0 0
          %627 = vmatprep.subr.bf16.mxu0 0
          %628 = vmatpush1.bf16.msra.mxu0 0
          %629 = vmatprep.subr.bf16.mxu0 0
          %630 = vmatpush1.bf16.msra.mxu0 0
          %631 = vmatprep.mubr.bf16.mxu0 0
          %632 = vmatmul.mubr.bf16.gmra.mrb[0].mxu0 %v597
          %v633 = vpop.f32.mrb[0].mxu0
          %v634 = vadd.f32 %v581, %v633
          %v635 = vpop.f32.mrb[0].mxu0
          %v636 = vpop.f32.mrb[0].mxu0
          %v637 = vpop.f32.mrb[0].mxu0
          %638 = vdwg.mxu0
          %v639 = vld [vmem:[%s557] sm:$0xf]
          %v640 = vld [vmem:[%s557 + $0x4] sm:$0xf]
          %v641 = vld [vmem:[%s557 + $0x8] sm:$0xf]
          %v642 = vld [vmem:[%s557 + $0xc] sm:$0xf]
          %v643 = vld [vmem:[%s560] sm:$0x1]
          %v645 = vlaneseq
          %v646 = vshrl.u32 %v645, 7
          %v647 = vsub.s32 0, %v646
          %v648 = vrot.slane %v643, %v647
          %v654 = vunpack.c.l.b16 %v639
          %v655 = vunpack.c.l.b16 %v640
          %v656 = vunpack.c.l.b16 %v641
          %v657 = vunpack.c.l.b16 %v642
          %v658 = vpack.c.b16 %v655, %v654
          %v659 = vpack.c.b16 %v657, %v656
          %662 = vmatprep.subr.bf16.mxu0 0
          %663 = vmatpush1.bf16.msra.mxu0 %v658
          %664 = vmatprep.subr.bf16.mxu0 0
          %665 = vmatpush1.bf16.msra.mxu0 %v659
          %666 = vmatprep.subr.bf16.mxu0 0
          %667 = vmatpush1.bf16.msra.mxu0 0
          %668 = vmatprep.subr.bf16.mxu0 0
          %669 = vmatpush1.bf16.msra.mxu0 0
          %670 = vmatprep.subr.bf16.mxu0 0
          %671 = vmatpush1.bf16.msra.mxu0 0
          %672 = vmatprep.subr.bf16.mxu0 0
          %673 = vmatpush1.bf16.msra.mxu0 0
          %674 = vmatprep.subr.bf16.mxu0 0
          %675 = vmatpush1.bf16.msra.mxu0 0
          %676 = vmatprep.subr.bf16.mxu0 0
          %677 = vmatpush1.bf16.msra.mxu0 0
          %678 = vmatprep.subr.bf16.mxu0 0
          %679 = vmatpush1.bf16.msra.mxu0 0
          %680 = vmatprep.subr.bf16.mxu0 0
          %681 = vmatpush1.bf16.msra.mxu0 0
          %682 = vmatprep.subr.bf16.mxu0 0
          %683 = vmatpush1.bf16.msra.mxu0 0
          %684 = vmatprep.subr.bf16.mxu0 0
          %685 = vmatpush1.bf16.msra.mxu0 0
          %686 = vmatprep.subr.bf16.mxu0 0
          %687 = vmatpush1.bf16.msra.mxu0 0
          %688 = vmatprep.subr.bf16.mxu0 0
          %689 = vmatpush1.bf16.msra.mxu0 0
          %690 = vmatprep.subr.bf16.mxu0 0
          %691 = vmatpush1.bf16.msra.mxu0 0
          %692 = vmatprep.subr.bf16.mxu0 0
          %693 = vmatpush1.bf16.msra.mxu0 0
          %694 = vmatprep.mubr.bf16.mxu0 0
          %695 = vmatmul.mubr.bf16.gmra.mrb[0].mxu0 %v597
          %v696 = vpop.f32.mrb[0].mxu0
          %v697 = vadd.f32 %v648, %v696
          %v698 = vpop.f32.mrb[0].mxu0
          %v699 = vpop.f32.mrb[0].mxu0
          %v700 = vpop.f32.mrb[0].mxu0
          %701 = vdwg.mxu0
          %v702 = vpack.c.bf16 %v634, %v634
          %s703 = smul.addr %s36, 4
          %s704 = scalar_lea.vmem [#allocation3], %s703
          %vm705 = vcmask 60416
          %706 = vst.msk [vmem:[%s704] sm:$0xf] %vm705, %v702
          %v707 = vpack.c.bf16 %v697, %v697
          %s708 = smul.addr %s36, 4
          %s709 = scalar_lea.vmem [#allocation4], %s708
          %710 = vst.msk [vmem:[%s709] sm:$0xf] %vm705, %v707
        $region64: #{tpu_custom_call.1} parent=59 // pred_fallthru
          _
        %p711 = scmp.eq.s32.totalorder %s36, 0
        // Predicated region
        $region65: #{tpu_custom_call.1} parent=59 // pred_check
          %p712 = pneg %p711
        $region66: #{tpu_custom_call.1} parent=59 // pred_check_branch
          %714 = sbr.rel (%p712) target = $region68
        $region67: #{tpu_custom_call.1} parent=59 // pred_region
          %vm715 = vcmask 261120
          %716 = vst.msk [vmem:[#allocation2] sm:$0xff] %vm715, 0.0
        $region68: #{tpu_custom_call.1} parent=59 // pred_fallthru
          _
        %v717 = vld [vmem:[%s532] sm:$0xff]
        %v718 = vpack.c.bf16 %v717, %v717
        %v719 = vld [vmem:[%s541] sm:$0xf]
        %v720 = vld [vmem:[%s541 + $0x4] sm:$0xf]
        %v721 = vld [vmem:[%s541 + $0x8] sm:$0xf]
        %v722 = vld [vmem:[%s541 + $0xc] sm:$0xf]
        %v723 = vld [vmem:[%s544] sm:$0x1]
        %v725 = vlaneseq
        %v726 = vshrl.u32 %v725, 7
        %v727 = vsub.s32 0, %v726
        %v728 = vrot.slane %v723, %v727
        %v734 = vunpack.c.l.b16 %v719
        %v735 = vunpack.c.l.b16 %v720
        %v736 = vunpack.c.l.b16 %v721
        %v737 = vunpack.c.l.b16 %v722
        %v738 = vpack.c.b16 %v735, %v734
        %v739 = vpack.c.b16 %v737, %v736
        %vm742 = vcmask 261120
        %v744 = vsel %vm742, %v718, 0
        %746 = vmatprep.subr.bf16.mxu0 0
        %747 = vmatpush1.bf16.msra.mxu0 %v738
        %748 = vmatprep.subr.bf16.mxu0 0
        %749 = vmatpush1.bf16.msra.mxu0 %v739
        %750 = vmatprep.subr.bf16.mxu0 0
        %751 = vmatpush1.bf16.msra.mxu0 0
        %752 = vmatprep.subr.bf16.mxu0 0
        %753 = vmatpush1.bf16.msra.mxu0 0
        %754 = vmatprep.subr.bf16.mxu0 0
        %755 = vmatpush1.bf16.msra.mxu0 0
        %756 = vmatprep.subr.bf16.mxu0 0
        %757 = vmatpush1.bf16.msra.mxu0 0
        %758 = vmatprep.subr.bf16.mxu0 0
        %759 = vmatpush1.bf16.msra.mxu0 0
        %760 = vmatprep.subr.bf16.mxu0 0
        %761 = vmatpush1.bf16.msra.mxu0 0
        %762 = vmatprep.subr.bf16.mxu0 0
        %763 = vmatpush1.bf16.msra.mxu0 0
        %764 = vmatprep.subr.bf16.mxu0 0
        %765 = vmatpush1.bf16.msra.mxu0 0
        %766 = vmatprep.subr.bf16.mxu0 0
        %767 = vmatpush1.bf16.msra.mxu0 0
        %768 = vmatprep.subr.bf16.mxu0 0
        %769 = vmatpush1.bf16.msra.mxu0 0
        %770 = vmatprep.subr.bf16.mxu0 0
        %771 = vmatpush1.bf16.msra.mxu0 0
        %772 = vmatprep.subr.bf16.mxu0 0
        %773 = vmatpush1.bf16.msra.mxu0 0
        %774 = vmatprep.subr.bf16.mxu0 0
        %775 = vmatpush1.bf16.msra.mxu0 0
        %776 = vmatprep.subr.bf16.mxu0 0
        %777 = vmatpush1.bf16.msra.mxu0 0
        %778 = vmatprep.mubr.bf16.mxu0 0
        %779 = vmatmul.mubr.bf16.gmra.mrb[0].mxu0 %v744
        %v780 = vpop.f32.mrb[0].mxu0
        %v781 = vadd.f32 %v728, %v780
        %v782 = vpop.f32.mrb[0].mxu0
        %v783 = vpop.f32.mrb[0].mxu0
        %v784 = vpop.f32.mrb[0].mxu0
        %785 = vdwg.mxu0
        %s786 = smul.addr %s36, 4
        %s787 = scalar_lea.vmem [#allocation3], %s786
        %v788 = vld [vmem:[%s787] sm:$0xf]
        %s789 = smul.addr %s36, 4
        %s790 = scalar_lea.vmem [#allocation4], %s789
        %v791 = vld [vmem:[%s790] sm:$0xf]
        %v792 = vpack.c.bf16 %v781, %v781
        %vm793 = vcmask 64512
        %v795 = vsel %vm793, %v792, 0
        %v798 = vsel %vm793, %v788, 0
        %800 = vmatprep.subr.bf16.mxu0 0
        %801 = vmatpush1.bf16.xpose.msra.mxu0 %v798
        %802 = vmatprep.subr.bf16.mxu0 0
        %803 = vmatpush1.bf16.xpose.msra.mxu0 0
        %804 = vmatprep.subr.bf16.mxu0 0
        %805 = vmatpush1.bf16.xpose.msra.mxu0 0
        %806 = vmatprep.subr.bf16.mxu0 0
        %807 = vmatpush1.bf16.xpose.msra.mxu0 0
        %808 = vmatprep.subr.bf16.mxu0 0
        %809 = vmatpush1.bf16.xpose.msra.mxu0 0
        %810 = vmatprep.subr.bf16.mxu0 0
        %811 = vmatpush1.bf16.xpose.msra.mxu0 0
        %812 = vmatprep.subr.bf16.mxu0 0
        %813 = vmatpush1.bf16.xpose.msra.mxu0 0
        %814 = vmatprep.subr.bf16.mxu0 0
        %815 = vmatpush1.bf16.xpose.msra.mxu0 0
        %816 = vmatprep.subr.bf16.mxu0 0
        %817 = vmatpush1.bf16.xpose.msra.mxu0 0
        %818 = vmatprep.subr.bf16.mxu0 0
        %819 = vmatpush1.bf16.xpose.msra.mxu0 0
        %820 = vmatprep.subr.bf16.mxu0 0
        %821 = vmatpush1.bf16.xpose.msra.mxu0 0
        %822 = vmatprep.subr.bf16.mxu0 0
        %823 = vmatpush1.bf16.xpose.msra.mxu0 0
        %824 = vmatprep.subr.bf16.mxu0 0
        %825 = vmatpush1.bf16.xpose.msra.mxu0 0
        %826 = vmatprep.subr.bf16.mxu0 0
        %827 = vmatpush1.bf16.xpose.msra.mxu0 0
        %828 = vmatprep.subr.bf16.mxu0 0
        %829 = vmatpush1.bf16.xpose.msra.mxu0 0
        %830 = vmatprep.subr.bf16.mxu0 0
        %831 = vmatpush1.bf16.xpose.msra.mxu0 0
        %832 = vmatprep.mubr.bf16.mxu0 0
        %833 = vmatmul.mubr.bf16.gmra.mrb[0].mxu0 %v795
        %v834 = vpop.f32.mrb[0].mxu0
        %v835 = vadd.f32 0.0, %v834
        %v836 = vpop.f32.mrb[0].mxu0
        %v837 = vpop.f32.mrb[0].mxu0
        %v838 = vpop.f32.mrb[0].mxu0
        %839 = vdwg.mxu0
        %v840 = vlaneseq
        %v841 = vshrl.u32 %v840, 7
        %s842 = smul.u32 %s35, 8
        %v843 = vstv %s842
        %v844 = vadd.s32 %v841, %v843
        %v845 = vlaneseq
        %v846 = vand.u32 %v845, 127
        %vm847 = vcmp.le.s32.totalorder %v846, %v844
        %v848 = vsel %vm847, %v835, -1e+09
        %v849 = vsel %vm793, %v848, -inf
        %850 = vmax.xlane.f32.xlu0 %v849
        %v851 = vpop.xlane.xlu0 %850
        %v852 = vsub.f32 %v848, %v851
        %v853 = vmul.f32 %v852, 1.442695
        %v854 = vpow.pop %v853
        %v855 = vsel %vm793, %v854, 0.0
        %856 = vadd.xlane.f32.xlu0 %v855
        %v857 = vpop.xlane.xlu0 %856
        %v858 = vrcp.pop %v857
        %v859 = vmul.f32 %v854, %v858
        %860 = vst.msk [vmem:[%s525] sm:$0xff] %vm793, %v859
        %v861 = vpack.c.bf16 %v859, %v859
        %v863 = vsel %vm793, %v861, 0
        %vm865 = vcmask 1043456
        %v867 = vsel %vm865, %v791, 0
        %869 = vmatprep.subr.bf16.mxu0 0
        %870 = vmatpush1.bf16.msra.mxu0 %v867
        %871 = vmatprep.subr.bf16.mxu0 0
        %872 = vmatpush1.bf16.msra.mxu0 0
        %873 = vmatprep.subr.bf16.mxu0 0
        %874 = vmatpush1.bf16.msra.mxu0 0
        %875 = vmatprep.subr.bf16.mxu0 0
        %876 = vmatpush1.bf16.msra.mxu0 0
        %877 = vmatprep.subr.bf16.mxu0 0
        %878 = vmatpush1.bf16.msra.mxu0 0
        %879 = vmatprep.subr.bf16.mxu0 0
        %880 = vmatpush1.bf16.msra.mxu0 0
        %881 = vmatprep.subr.bf16.mxu0 0
        %882 = vmatpush1.bf16.msra.mxu0 0
        %883 = vmatprep.subr.bf16.mxu0 0
        %884 = vmatpush1.bf16.msra.mxu0 0
        %885 = vmatprep.subr.bf16.mxu0 0
        %886 = vmatpush1.bf16.msra.mxu0 0
        %887 = vmatprep.subr.bf16.mxu0 0
        %888 = vmatpush1.bf16.msra.mxu0 0
        %889 = vmatprep.subr.bf16.mxu0 0
        %890 = vmatpush1.bf16.msra.mxu0 0
        %891 = vmatprep.subr.bf16.mxu0 0
        %892 = vmatpush1.bf16.msra.mxu0 0
        %893 = vmatprep.subr.bf16.mxu0 0
        %894 = vmatpush1.bf16.msra.mxu0 0
        %895 = vmatprep.subr.bf16.mxu0 0
        %896 = vmatpush1.bf16.msra.mxu0 0
        %897 = vmatprep.subr.bf16.mxu0 0
        %898 = vmatpush1.bf16.msra.mxu0 0
        %899 = vmatprep.subr.bf16.mxu0 0
        %900 = vmatpush1.bf16.msra.mxu0 0
        %901 = vmatprep.mubr.bf16.mxu0 0
        %902 = vmatmul.mubr.bf16.gmra.mrb[0].mxu0 %v863
        %v903 = vpop.f32.mrb[0].mxu0
        %v904 = vadd.f32 0.0, %v903
        %v905 = vpop.f32.mrb[0].mxu0
        %v906 = vpop.f32.mrb[0].mxu0
        %v907 = vpop.f32.mrb[0].mxu0
        %908 = vdwg.mxu0
        %v909 = vld [vmem:[#allocation2] sm:$0xff]
        %v910 = vpack.c.bf16 %v904, %v904
        %v911 = vld [vmem:[%s564] sm:$0xf]
        %v913 = vsel %vm793, %v910, 0
        %v916 = vsel %vm865, %v911, 0
        %918 = vmatprep.subr.bf16.mxu0 0
        %919 = vmatpush1.bf16.msra.mxu0 %v916
        %920 = vmatprep.subr.bf16.mxu0 0
        %921 = vmatpush1.bf16.msra.mxu0 0
        %922 = vmatprep.subr.bf16.mxu0 0
        %923 = vmatpush1.bf16.msra.mxu0 0
        %924 = vmatprep.subr.bf16.mxu0 0
        %925 = vmatpush1.bf16.msra.mxu0 0
        %926 = vmatprep.subr.bf16.mxu0 0
        %927 = vmatpush1.bf16.msra.mxu0 0
        %928 = vmatprep.subr.bf16.mxu0 0
        %929 = vmatpush1.bf16.msra.mxu0 0
        %930 = vmatprep.subr.bf16.mxu0 0
        %931 = vmatpush1.bf16.msra.mxu0 0
        %932 = vmatprep.subr.bf16.mxu0 0
        %933 = vmatpush1.bf16.msra.mxu0 0
        %934 = vmatprep.subr.bf16.mxu0 0
        %935 = vmatpush1.bf16.msra.mxu0 0
        %936 = vmatprep.subr.bf16.mxu0 0
        %937 = vmatpush1.bf16.msra.mxu0 0
        %938 = vmatprep.subr.bf16.mxu0 0
        %939 = vmatpush1.bf16.msra.mxu0 0
        %940 = vmatprep.subr.bf16.mxu0 0
        %941 = vmatpush1.bf16.msra.mxu0 0
        %942 = vmatprep.subr.bf16.mxu0 0
        %943 = vmatpush1.bf16.msra.mxu0 0
        %944 = vmatprep.subr.bf16.mxu0 0
        %945 = vmatpush1.bf16.msra.mxu0 0
        %946 = vmatprep.subr.bf16.mxu0 0
        %947 = vmatpush1.bf16.msra.mxu0 0
        %948 = vmatprep.subr.bf16.mxu0 0
        %949 = vmatpush1.bf16.msra.mxu0 0
        %950 = vmatprep.mubr.bf16.mxu0 0
        %951 = vmatmul.mubr.bf16.gmra.mrb[0].mxu0 %v913
        %v952 = vpop.f32.mrb[0].mxu0
        %v953 = vadd.f32 0.0, %v952
        %v954 = vpop.f32.mrb[0].mxu0
        %v955 = vpop.f32.mrb[0].mxu0
        %v956 = vpop.f32.mrb[0].mxu0
        %957 = vdwg.mxu0
        %v958 = vadd.f32 %v909, %v953
        %959 = vst.msk [vmem:[#allocation2] sm:$0xff] %vm742, %v958
        %p960 = scmp.eq.s32.totalorder %s36, 3
        // Predicated region
        $region69: #{tpu_custom_call.1} parent=59 // pred_check
          %p961 = pneg %p960
        $region70: #{tpu_custom_call.1} parent=59 // pred_check_branch
          %963 = sbr.rel (%p961) target = $region72
        $region71: #{tpu_custom_call.1} parent=59 // pred_region
          %v964 = vld [vmem:[#allocation2] sm:$0xff]
          %v965 = vld [vmem:[%s9] sm:$0x1]
          %v967 = vlaneseq
          %v968 = vshrl.u32 %v967, 7
          %v969 = vsub.s32 0, %v968
          %v970 = vrot.slane %v965, %v969
          %v972 = vadd.f32 %v964, %v970
          %973 = vst.msk [vmem:[%s518] sm:$0xff] %vm742, %v972
        $region72: #{tpu_custom_call.1} parent=59 // pred_fallthru
          _
        %s974 = sand.u32 %s315, 1
        %s975 = scalar_lea.sflag [#allocation6], %s974
        %s976 = sand.u32 %s315, 1
        %s977 = smul.addr %s976, 8
        %s978 = scalar_lea.vmem [#allocation5], %s977
        %s979 = sand.u32 %s345, 1
        %s980 = scalar_lea.sflag [#allocation8], %s979
        %s981 = sand.u32 %s345, 1
        %s982 = smul.addr %s981, 8
        %s983 = scalar_lea.vmem [#allocation7], %s982
        // Predicated region
        $region73: #{tpu_custom_call.1} parent=59 // pred_check
          %p984 = pneg %p325
        $region74: #{tpu_custom_call.1} parent=59 // pred_check_branch
          %986 = sbr.rel (%p984) target = $region76
        $region75: #{tpu_custom_call.1} parent=59 // pred_region
          %s988 = ssub.s32 128, 128
          %989 = vsyncadd %s975, %s988
          %s990 = sadd.s32 %s35, %s34
          %s991 = smul.addr %s990, 128
          %s992 = scalar_lea.hbm %s10, %s991
          %s994 = sshll.u32 %s978, 4
          %s995 = int_to_ptr.vmem [resolvable:$true] %s994
          %997 = dma.vmem_to_hbm [thread:$0]  %s995, 128, %s992, %s975
        $region76: #{tpu_custom_call.1} parent=59 // pred_fallthru
          _
        // Predicated region
        $region77: #{tpu_custom_call.1} parent=59 // pred_check
          %p998 = pneg %p355
        $region78: #{tpu_custom_call.1} parent=59 // pred_check_branch
          %1000 = sbr.rel (%p998) target = $region80
        $region79: #{tpu_custom_call.1} parent=59 // pred_region
          %s1002 = ssub.s32 128, 128
          %1003 = vsyncadd %s980, %s1002
          %s1004 = sadd.s32 %s35, %s36
          %s1005 = smul.addr %s34, 4
          %s1006 = sadd.s32 %s1004, %s1005
          %s1007 = smul.addr %s1006, 128
          %s1008 = scalar_lea.hbm %s11, %s1007
          %s1010 = sshll.u32 %s983, 4
          %s1011 = int_to_ptr.vmem [resolvable:$true] %s1010
          %1013 = dma.vmem_to_hbm [thread:$0]  %s1011, 128, %s1008, %s980
        $region80: #{tpu_custom_call.1} parent=59 // pred_fallthru
          _
      $region60: #{tpu_custom_call.1} parent=5 // pred_fallthru
        _
      %p1014 = scmp.le.s32.totalorder 2, %s24
      // Predicated region
      $region81: #{tpu_custom_call.1} parent=5 // pred_check
        %p1015 = pneg %p1014
      $region82: #{tpu_custom_call.1} parent=5 // pred_check_branch
        %1017 = sbr.rel (%p1015) target = $region84
      $region83: #{tpu_custom_call.1} parent=5 // pred_region
        %s1018 = ssub.s32 %s24, 2
        // Predicated region
        $region85: #{tpu_custom_call.1} parent=83 // pred_check
          %p1019 = pneg %p331
        $region86: #{tpu_custom_call.1} parent=83 // pred_check_branch
          %1021 = sbr.rel (%p1019) target = $region88
        $region87: #{tpu_custom_call.1} parent=83 // pred_region
          %s1022 = sand.u32 %s316, 1
          %s1023 = scalar_lea.sflag [#allocation6], %s1022
          %s1024 = sand.u32 %s316, 1
          %s1025 = smul.addr %s1024, 8
          %s1026 = scalar_lea.vmem [#allocation5], %s1025
          %1027 = dma.done %s1023, 128
        $region88: #{tpu_custom_call.1} parent=83 // pred_fallthru
          _
        // Predicated region
        $region89: #{tpu_custom_call.1} parent=83 // pred_check
          %p1028 = pneg %p361
        $region90: #{tpu_custom_call.1} parent=83 // pred_check_branch
          %1030 = sbr.rel (%p1028) target = $region92
        $region91: #{tpu_custom_call.1} parent=83 // pred_region
          %s1031 = sand.u32 %s346, 1
          %s1032 = scalar_lea.sflag [#allocation8], %s1031
          %s1033 = sand.u32 %s346, 1
          %s1034 = smul.addr %s1033, 8
          %s1035 = scalar_lea.vmem [#allocation7], %s1034
          %1036 = dma.done %s1032, 128
        $region92: #{tpu_custom_call.1} parent=83 // pred_fallthru
          _
      $region84: #{tpu_custom_call.1} parent=5 // pred_fallthru
        _
    $region6: #{tpu_custom_call.1} parent=1 // loop_footer
      %s28 = sadd.s32 1, %s24
    $region7: #{tpu_custom_call.1} parent=1 // loop_footer_branch
      %23 = sbr.rel target = $region3
    $region8: #{tpu_custom_call.1} parent=1 // loop_exit
      _
    %1037 = vsyncpa [#allocation6], 1
    %s1038 = scalar_lea.sflag [#allocation6], 1
    %1039 = vsyncpa %s1038, 1
    %1040 = vsyncpa [#allocation8], 1
    %s1041 = scalar_lea.sflag [#allocation8], 1
    %1042 = vsyncpa %s1041, 1

</llo_original>
